<compile_context>
chip_gen: v7x
topology: tpu7x:2x2x1
jax: 0.10.0
libtpu: 0.0.40
codegen_flags: <defaults>
</compile_context>

<pallas_src>
import math

import jax
import jax.numpy as jnp
from jax.experimental import pallas as pl
from jax.experimental.pallas import tpu as pltpu


def _round_up(x, m):
    return ((x + m - 1) // m) * m


def _vmem_budget_bytes():
    """Per-generation VMEM budget (v5e/v6e: 128 MiB parts, v7x: 64 MiB)."""
    cap = 64 * 1024 * 1024  # conservative (v7x-sized) fallback
    try:
        info = pltpu.get_tpu_info()
        cap = int(getattr(info, "vmem_capacity_bytes", cap)) or cap
    except Exception:
        pass
    budget = int(cap * 0.40)                      # block-sizing budget (headroom)
    limit = min(int(cap * 0.75), 96 * 1024 * 1024)
    return budget, limit


def _choose_block_b(B, n_keys, dim_q, dim_k, dim_v, kv_itemsize,
                    out_itemsize, wts_itemsize, vmem_budget):
    """Largest batch tile (multiple of 8) whose double-buffered I/O blocks plus
    in-kernel f32 temporaries fit the per-generation VMEM budget, capped so the
    grid keeps at least 2 steps (megacore sharding on v7x)."""
    io_per_row = 2 * (dim_q * 4                                  # Q (f32, dbl-buf)
                      + n_keys * (dim_k + dim_v) * kv_itemsize   # K, V
                      + dim_v * out_itemsize + n_keys * wts_itemsize)
    tmp_per_row = 4 * (n_keys * (dim_k + dim_v)      # broadcast products (f32)
                       + dim_k + dim_v + 4 * n_keys)  # qp / out / softmax rows
    per_row = max(io_per_row + tmp_per_row, 1)
    cap = max(8, (vmem_budget // per_row) // 8 * 8)
    cap = min(cap, 256)
    if B <= 8:
        return B                                   # full-dim block, always legal
    two_steps = _round_up((B + 1) // 2, 8)         # keep >= 2 grid steps
    return max(8, min(cap, two_steps, (B // 8) * 8))


def _attention_kernel(q_ref, k_ref, v_ref, w_ref, out_ref, wts_ref):
    # q_ref:   (TB, dim_q)          f32
    # k_ref:   (TB, n_keys, dim_k)  matmul_dtype
    # v_ref:   (TB, n_keys, dim_v)  matmul_dtype
    # w_ref:   (dim_q, dim_k)       matmul_dtype, softmax scale pre-folded, resident
    # out_ref: (TB, dim_v)
    # wts_ref: (TB, n_keys)

    # Project Q (not K) on the MXU: qp = Q @ (scale * Wk)  -> [TB, dim_k].
    # Q.(K Wk^T) == (Q Wk).K, and the linear bias only shifts each softmax row
    # by a constant, so it is dropped.
    qp = jnp.dot(q_ref[...].astype(w_ref.dtype), w_ref[...],
                 preferred_element_type=jnp.float32)           # [TB, dim_k] f32

    # energies[b, n] = sum_k qp[b, k] * K[b, n, k]; K stays in its native dtype
    # and the multiply promotes to f32 (no explicit f32 copy of the K block).
    energies = jnp.sum(qp[:, None, :] * k_ref[...], axis=-1)   # [TB, n_keys] f32

    # Numerically-stable softmax over n_keys, all f32.  Exact normalization so
    # returned rows sum to 1 to f32 precision.
    m = jnp.max(energies, axis=-1, keepdims=True)
    p = jnp.exp(energies - m)
    denom = jnp.sum(p, axis=-1, keepdims=True)
    weights = p / denom                                        # [TB, n_keys] f32

    # output[b] = sum_n weights[b, n] * V[b, n, :]; V in native dtype, f32 acc.
    out = jnp.sum(weights[:, :, None] * v_ref[...], axis=1)    # [TB, dim_v] f32

    out_ref[...] = out.astype(out_ref.dtype)
    wts_ref[...] = weights.astype(wts_ref.dtype)


def scaled_general_attention(Q, K, V, Wk, bk=None, *,
                             matmul_dtype=jnp.bfloat16,
                             out_dtype=jnp.float32,
                             block_b=None):
    """Q: [B, dim_q], K: [B, n_keys, dim_k], V: [B, n_keys, dim_v],
    Wk: [dim_q, dim_k] (nn.Linear weight), bk: [dim_q] (accepted for API
    parity, but it only shifts each softmax row by a constant and is therefore
    mathematically cancelled; it is never read).

    matmul_dtype: dtype of the K/V DMAs and the MXU projection (bf16 default on
    every generation -- the kernel is HBM-bandwidth-bound; softmax stays f32).
    out_dtype:    dtype of the returned output/weights (bf16 halves writeback).
    """
    del bk  # softmax-invariant: exactly cancelled by the row-wise softmax.
    B, dim_q = Q.shape
    _, n_keys, dim_k = K.shape
    dim_v = V.shape[-1]
    scale = 1.0 / math.sqrt(dim_k)

    # Fold the softmax scale into the weight; no transpose is needed because we
    # project Q: qp = Q @ Wk has shape [B, dim_k].
    wk_s = (Wk * scale).astype(matmul_dtype)                   # [dim_q, dim_k]

    # TODO(synk): ideally the producer already emits bf16 K/V so these casts do
    # not add an extra full HBM pass over K/V.
    K = K.astype(matmul_dtype)
    V = V.astype(matmul_dtype)
    Q = Q.astype(jnp.float32)

    budget, vmem_limit = _vmem_budget_bytes()
    if block_b is None:
        block_b = _choose_block_b(
            B, n_keys, dim_q, dim_k, dim_v,
            jnp.dtype(matmul_dtype).itemsize,
            jnp.dtype(out_dtype).itemsize, jnp.dtype(out_dtype).itemsize,
            budget)
    block_b = int(block_b)

    # No padding of K/V: the grid covers ceil(B / block_b) tiles; the ragged
    # last tile uses Pallas' masked edge-block handling.  Rows are independent,
    # so edge garbage can never leak into valid output rows.
    grid = (pl.cdiv(B, block_b),)

    out_shapes = (
        jax.ShapeDtypeStruct((B, dim_v), out_dtype),
        jax.ShapeDtypeStruct((B, n_keys), out_dtype),
    )

    # NOTE: for production shapes with n_keys/dim_v < 128 the out/wts stores are
    # lane-masked; folding them into a lane-dense slab is a second-order lever.
    # K/V keep the default double buffering (Buffered(2)) -- deeper buffering
    # would only shrink the achievable block_b on v7x's 64 MiB VMEM.
    grid_spec = pltpu.PrefetchScalarGridSpec(
        num_scalar_prefetch=0,
        grid=grid,
        in_specs=[
            pl.BlockSpec((block_b, dim_q), lambda b: (b, 0)),             # Q
            pl.BlockSpec((block_b, n_keys, dim_k), lambda b: (b, 0, 0)),  # K
            pl.BlockSpec((block_b, n_keys, dim_v), lambda b: (b, 0, 0)),  # V
            pl.BlockSpec((dim_q, dim_k), lambda b: (0, 0)),               # scale*Wk
        ],
        out_specs=[
            pl.BlockSpec((block_b, dim_v), lambda b: (b, 0)),             # output
            pl.BlockSpec((block_b, n_keys), lambda b: (b, 0)),            # weights
        ],
    )

    out, wts = pl.pallas_call(
        _attention_kernel,
        out_shape=out_shapes,
        grid_spec=grid_spec,
        compiler_params=pltpu.CompilerParams(
            dimension_semantics=("parallel",),   # batch tiles shard across TCs
            vmem_limit_bytes=vmem_limit,
        ),
    )(Q, K, V, wk_s)
    return out, wts


def _reference(Q, K, V, Wk, bk):
    dim_k = K.shape[-1]
    scale = 1.0 / math.pow(dim_k, 0.5)
    keys = jnp.einsum("bnk,qk->bnq", K, Wk) + bk           # [B, n_keys, dim_q]
    energies = jnp.einsum("bq,bnq->bn", Q, keys) * scale   # [B, n_keys]
    weights = jax.nn.softmax(energies, axis=-1)
    output = jnp.einsum("bn,bnv->bv", weights, V)
    return output, weights


if __name__ == "__main__":
    key = jax.random.PRNGKey(0)
    B, n_keys, dim_q, dim_k, dim_v = 2, 8, 32, 16, 32

    k_q, k_k, k_v, k_w, k_b = jax.random.split(key, 5)
    Q = jax.random.normal(k_q, (B, dim_q), dtype=jnp.float32)
    K = jax.random.normal(k_k, (B, n_keys, dim_k), dtype=jnp.float32)
    V = jax.random.normal(k_v, (B, n_keys, dim_v), dtype=jnp.float32)

    # nn.Linear(dim_k, dim_q)-style init: weight [dim_q, dim_k], bias [dim_q]
    bound = 1.0 / math.sqrt(dim_k)
    Wk = jax.random.uniform(k_w, (dim_q, dim_k), jnp.float32, -bound, bound)
    bk = jax.random.uniform(k_b, (dim_q,), jnp.float32, -bound, bound)

    ref_out, ref_wts = _reference(Q, K, V, Wk, bk)

    # f32 MXU path: tight check against the reference (bias dropped in-kernel
    # is exact for the returned outputs/weights).
    out, wts = scaled_general_attention(Q, K, V, Wk, bk, matmul_dtype=jnp.float32)
    jax.block_until_ready((out, wts))
    assert out.shape == (B, dim_v) and wts.shape == (B, n_keys)
    assert jnp.allclose(out, ref_out, atol=5e-3, rtol=5e-3)
    assert jnp.allclose(wts, ref_wts, atol=5e-3, rtol=5e-3)
    assert jnp.allclose(jnp.sum(wts, axis=-1), 1.0, atol=1e-3)

    # Default bf16 K/V path (looser tolerance from bf16 operands; softmax f32).
    out_bf, wts_bf = scaled_general_attention(Q, K, V, Wk, bk)
    jax.block_until_ready((out_bf, wts_bf))
    assert jnp.allclose(out_bf, ref_out, atol=1e-1, rtol=1e-1)
    assert jnp.allclose(wts_bf, ref_wts, atol=1e-1, rtol=1e-1)
    assert jnp.allclose(jnp.sum(wts_bf, axis=-1), 1.0, atol=1e-3)

    # Multi-tile grid with a ragged last tile (B=20, block_b=8 -> 3 steps,
    # no padding of K/V anywhere).
    B2 = 20
    k_q2, k_k2, k_v2 = jax.random.split(jax.random.PRNGKey(1), 3)
    Q2 = jax.random.normal(k_q2, (B2, dim_q), dtype=jnp.float32)
    K2 = jax.random.normal(k_k2, (B2, n_keys, dim_k), dtype=jnp.float32)
    V2 = jax.random.normal(k_v2, (B2, n_keys, dim_v), dtype=jnp.float32)
    ref_out2, ref_wts2 = _reference(Q2, K2, V2, Wk, bk)

    out2, wts2 = scaled_general_attention(Q2, K2, V2, Wk, bk,
                                          matmul_dtype=jnp.float32, block_b=8)
    jax.block_until_ready((out2, wts2))
    assert out2.shape == (B2, dim_v) and wts2.shape == (B2, n_keys)
    assert jnp.allclose(out2, ref_out2, atol=5e-3, rtol=5e-3)
    assert jnp.allclose(wts2, ref_wts2, atol=5e-3, rtol=5e-3)

    # Auto block_b path (exercises get_tpu_info budgeting + >=2-step cap).
    out3, wts3 = scaled_general_attention(Q2, K2, V2, Wk, bk)
    jax.block_until_ready((out3, wts3))
    assert jnp.allclose(out3, ref_out2, atol=1e-1, rtol=1e-1)
    assert jnp.allclose(wts3, ref_wts2, atol=1e-1, rtol=1e-1)

    print("KERNEL_OK")
</pallas_src>

<mosaic_0001>
module attributes {stable_mosaic.version = 11 : i64} {
  func.func @_attention_kernel(%arg0: i32, %arg1: memref<2x32xf32, #tpu.memory_space<vmem>>, %arg2: memref<2x8x16xf32, #tpu.memory_space<vmem>>, %arg3: memref<2x8x32xf32, #tpu.memory_space<vmem>>, %arg4: memref<32x16xf32, #tpu.memory_space<vmem>>, %arg5: memref<2x32xf32, #tpu.memory_space<vmem>>, %arg6: memref<2x8xf32, #tpu.memory_space<vmem>>) attributes {dimension_semantics = [#tpu.dimension_semantics<parallel>], iteration_bounds = array<i64: 1>, scalar_prefetch = 0 : i64, scratch_operands = 0 : i64, tpu.core_type = #tpu.core_type<tc>, window_params = [{transform_indices = @transform_0, window_bounds = array<i64: 2, 32>}, {transform_indices = @transform_1, window_bounds = array<i64: 2, 8, 16>}, {transform_indices = @transform_2, window_bounds = array<i64: 2, 8, 32>}, {pipeline_mode = #tpu.pipeline_mode<synchronous>, transform_indices = @transform_3, window_bounds = array<i64: 32, 16>}, {transform_indices = @transform_4, window_bounds = array<i64: 2, 32>}, {transform_indices = @transform_5, window_bounds = array<i64: 2, 8>}]} {
    %c0 = arith.constant 0 : index
    %c0_0 = arith.constant 0 : index
    %0 = vector.load %arg1[%c0, %c0_0] : memref<2x32xf32, #tpu.memory_space<vmem>>, vector<2x32xf32>
    %c0_1 = arith.constant 0 : index
    %c0_2 = arith.constant 0 : index
    %1 = vector.load %arg4[%c0_1, %c0_2] : memref<32x16xf32, #tpu.memory_space<vmem>>, vector<32x16xf32>
    %cst = arith.constant dense<0.000000e+00> : vector<2x16xf32>
    %2 = tpu.matmul %0, %1, %cst {dimension_numbers = #tpu.dot_dimension_numbers<[1], [0], [0], [1], [0, 0, 1, 1], [], []>} : vector<2x32xf32>, vector<32x16xf32>, vector<2x16xf32> -> vector<2x16xf32>
    %3 = vector.shape_cast %2 : vector<2x16xf32> to vector<2x1x16xf32>
    %c0_3 = arith.constant 0 : index
    %c0_4 = arith.constant 0 : index
    %c0_5 = arith.constant 0 : index
    %4 = vector.load %arg2[%c0_3, %c0_4, %c0_5] : memref<2x8x16xf32, #tpu.memory_space<vmem>>, vector<2x8x16xf32>
    %5 = vector.broadcast %3 : vector<2x1x16xf32> to vector<2x8x16xf32>
    %6 = arith.mulf %5, %4 : vector<2x8x16xf32>
    %cst_6 = arith.constant dense<0.000000e+00> : vector<2x8xf32>
    %7 = vector.multi_reduction <add>, %6, %cst_6 [2] : vector<2x8x16xf32> to vector<2x8xf32>
    %cst_7 = arith.constant dense<0xFF800000> : vector<2xf32>
    %8 = vector.multi_reduction <maximumf>, %7, %cst_7 [1] : vector<2x8xf32> to vector<2xf32>
    %9 = vector.shape_cast %8 : vector<2xf32> to vector<2x1xf32>
    %10 = vector.broadcast %9 : vector<2x1xf32> to vector<2x8xf32>
    %11 = arith.subf %7, %10 : vector<2x8xf32>
    %12 = math.exp %11 : vector<2x8xf32>
    %cst_8 = arith.constant dense<0.000000e+00> : vector<2xf32>
    %13 = vector.multi_reduction <add>, %12, %cst_8 [1] : vector<2x8xf32> to vector<2xf32>
    %14 = vector.shape_cast %13 : vector<2xf32> to vector<2x1xf32>
    %15 = vector.broadcast %14 : vector<2x1xf32> to vector<2x8xf32>
    %16 = arith.divf %12, %15 : vector<2x8xf32>
    %17 = vector.shape_cast %16 : vector<2x8xf32> to vector<2x8x1xf32>
    %c0_9 = arith.constant 0 : index
    %c0_10 = arith.constant 0 : index
    %c0_11 = arith.constant 0 : index
    %18 = vector.load %arg3[%c0_9, %c0_10, %c0_11] : memref<2x8x32xf32, #tpu.memory_space<vmem>>, vector<2x8x32xf32>
    %19 = vector.broadcast %17 : vector<2x8x1xf32> to vector<2x8x32xf32>
    %20 = arith.mulf %19, %18 : vector<2x8x32xf32>
    %cst_12 = arith.constant dense<0.000000e+00> : vector<2x32xf32>
    %21 = vector.multi_reduction <add>, %20, %cst_12 [1] : vector<2x8x32xf32> to vector<2x32xf32>
    %c0_13 = arith.constant 0 : index
    %c0_14 = arith.constant 0 : index
    %22 = vector.load %arg5[%c0_13, %c0_14] : memref<2x32xf32, #tpu.memory_space<vmem>>, vector<2x32xf32>
    tpu.vector_store %arg5[%c0_13, %c0_14], %21 {strides = array<i32>} : memref<2x32xf32, #tpu.memory_space<vmem>>, vector<2x32xf32>,
    %c0_15 = arith.constant 0 : index
    %c0_16 = arith.constant 0 : index
    %23 = vector.load %arg6[%c0_15, %c0_16] : memref<2x8xf32, #tpu.memory_space<vmem>>, vector<2x8xf32>
    tpu.vector_store %arg6[%c0_15, %c0_16], %16 {strides = array<i32>} : memref<2x8xf32, #tpu.memory_space<vmem>>, vector<2x8xf32>,
    return
  }
  func.func @transform_0(%arg0: i32) -> (i32, i32) {
    %c0_i32 = arith.constant 0 : i32
    %c0_i32_0 = arith.constant 0 : i32
    return %arg0, %c0_i32 : i32, i32
  }
  func.func @transform_1(%arg0: i32) -> (i32, i32, i32) {
    %c0_i32 = arith.constant 0 : i32
    %c0_i32_0 = arith.constant 0 : i32
    %c0_i32_1 = arith.constant 0 : i32
    return %arg0, %c0_i32, %c0_i32_0 : i32, i32, i32
  }
  func.func @transform_2(%arg0: i32) -> (i32, i32, i32) {
    %c0_i32 = arith.constant 0 : i32
    %c0_i32_0 = arith.constant 0 : i32
    %c0_i32_1 = arith.constant 0 : i32
    return %arg0, %c0_i32, %c0_i32_0 : i32, i32, i32
  }
  func.func @transform_3(%arg0: i32) -> (i32, i32) {
    %c0_i32 = arith.constant 0 : i32
    %c0_i32_0 = arith.constant 0 : i32
    %c0_i32_1 = arith.constant 0 : i32
    return %c0_i32, %c0_i32_0 : i32, i32
  }
  func.func @transform_4(%arg0: i32) -> (i32, i32) {
    %c0_i32 = arith.constant 0 : i32
    %c0_i32_0 = arith.constant 0 : i32
    return %arg0, %c0_i32 : i32, i32
  }
  func.func @transform_5(%arg0: i32) -> (i32, i32) {
    %c0_i32 = arith.constant 0 : i32
    %c0_i32_0 = arith.constant 0 : i32
    return %arg0, %c0_i32 : i32, i32
  }
}

</mosaic_0001>

<llo_original>
// kernel: tpu_custom_call.1
$region0: #{tpu_custom_call.1}
  #allocation0 [shape = 'u32[]', space=smem, size = 0x4, offset = 0x4, fixed_abs, tag = 'smem constant byte address 0x4 - core index']
  #allocation1 [shape = 'u32[144,128]{1,0:T(1,128)}', space=vmem, size = 0x12000, scoped, tag = 'internal scratch']
  %s0 = inlined_call_operand.vmem [shape: f32[2,32], index: 0, kind: input, shape index: {}]
  %s1 = inlined_call_operand.vmem [shape: f32[2,8,16], index: 1, kind: input, shape index: {}]
  %s2 = inlined_call_operand.vmem [shape: f32[2,8,32], index: 2, kind: input, shape index: {}]
  %s3 = inlined_call_operand.vmem [shape: f32[32,16], index: 3, kind: input, shape index: {}]
  %s4 = inlined_call_operand.hbm [shape: f32[2,32], index: 4, kind: output, shape index: {0}]
  %s5 = inlined_call_operand.hbm [shape: f32[2,8], index: 5, kind: output, shape index: {1}]
  %6 = xla_tuple %s4, %s5
  %s7 = sld [smem:[#allocation0]]
  $region34: #{tpu_custom_call.1} parent=0
    _
  %s9 = ssub.s32 1, %s7
  %s10 = scalar_select 0, %s9, %s7
  $region1: #{tpu_custom_call.1} parent=0
    #allocation2 [shape = 'u8[1024]{0}', space=vmem, size = 0x400, scoped, tag = 'output window, operand 0, single buffered']
    #allocation3 [shape = 's32[1]{0}', space=sflag, size = 0x4, scoped, tag = 'scoped memory for tpu_custom_call.1']
    #allocation4 [shape = 'u8[1024]{0}', space=vmem, size = 0x400, scoped, tag = 'output window, operand 1, single buffered']
    #allocation5 [shape = 's32[1]{0}', space=sflag, size = 0x4, scoped, tag = 'scoped memory for tpu_custom_call.1']
    %11 = vsyncpa [#allocation3], 0
    %12 = vsyncpa [#allocation5], 0
    // Predicated region
    $region2: #{tpu_custom_call.1} parent=1 // pred_check
      _
    $region3: #{tpu_custom_call.1} parent=1 // pred_check_branch
      %14 = sbr.rel (0) target = $region5
    $region4: #{tpu_custom_call.1} parent=1 // pred_region
      _
    $region5: #{tpu_custom_call.1} parent=1 // pred_fallthru
      _
    // Predicated region
    $region6: #{tpu_custom_call.1} parent=1 // pred_check
      _
    $region7: #{tpu_custom_call.1} parent=1 // pred_check_branch
      %16 = sbr.rel (0) target = $region9
    $region8: #{tpu_custom_call.1} parent=1 // pred_region
      _
    $region9: #{tpu_custom_call.1} parent=1 // pred_fallthru
      _
    // Predicated region
    $region10: #{tpu_custom_call.1} parent=1 // pred_check
      _
    $region11: #{tpu_custom_call.1} parent=1 // pred_check_branch
      %18 = sbr.rel (0) target = $region13
    $region12: #{tpu_custom_call.1} parent=1 // pred_region
      _
    $region13: #{tpu_custom_call.1} parent=1 // pred_fallthru
      _
    // Predicated region
    $region14: #{tpu_custom_call.1} parent=1 // pred_check
      _
    $region15: #{tpu_custom_call.1} parent=1 // pred_check_branch
      %20 = sbr.rel (0) target = $region17
    $region16: #{tpu_custom_call.1} parent=1 // pred_region
      _
    $region17: #{tpu_custom_call.1} parent=1 // pred_fallthru
      _
    %v21 = vld [vmem:[%s0] sm:$0x3]
    %v22 = vld [vmem:[%s3] sm:$0xff]
    %v23 = vld [vmem:[%s3 + $0x8] sm:$0xff]
    %v24 = vld [vmem:[%s3 + $0x10] sm:$0xff]
    %v25 = vld [vmem:[%s3 + $0x18] sm:$0xff]
    %vm26 = vcmask 261120
    %v28 = vsel %vm26, %v21, 0
    %30 = vmatprep.subr.mxu0 0.0
    %31 = vmatpush1.msra.mxu0 %v22
    %32 = vmatprep.subr.mxu0 0.0
    %33 = vmatpush1.msra.mxu0 %v23
    %34 = vmatprep.subr.mxu0 0.0
    %35 = vmatpush1.msra.mxu0 %v24
    %36 = vmatprep.subr.mxu0 0.0
    %37 = vmatpush1.msra.mxu0 %v25
    %38 = vmatprep.subr.mxu0 0.0
    %39 = vmatpush1.msra.mxu0 0.0
    %40 = vmatprep.subr.mxu0 0.0
    %41 = vmatpush1.msra.mxu0 0.0
    %42 = vmatprep.subr.mxu0 0.0
    %43 = vmatpush1.msra.mxu0 0.0
    %44 = vmatprep.subr.mxu0 0.0
    %45 = vmatpush1.msra.mxu0 0.0
    %46 = vmatprep.subr.mxu0 0.0
    %47 = vmatpush1.msra.mxu0 0.0
    %48 = vmatprep.subr.mxu0 0.0
    %49 = vmatpush1.msra.mxu0 0.0
    %50 = vmatprep.subr.mxu0 0.0
    %51 = vmatpush1.msra.mxu0 0.0
    %52 = vmatprep.subr.mxu0 0.0
    %53 = vmatpush1.msra.mxu0 0.0
    %54 = vmatprep.subr.mxu0 0.0
    %55 = vmatpush1.msra.mxu0 0.0
    %56 = vmatprep.subr.mxu0 0.0
    %57 = vmatpush1.msra.mxu0 0.0
    %58 = vmatprep.subr.mxu0 0.0
    %59 = vmatpush1.msra.mxu0 0.0
    %60 = vmatprep.subr.mxu0 0.0
    %61 = vmatpush1.msra.mxu0 0.0
    %62 = vmatprep.subr.mxu0 0.0
    %63 = vmatpush1.msra.mxu0 0.0
    %64 = vmatprep.subr.mxu0 0.0
    %65 = vmatpush1.msra.mxu0 0.0
    %66 = vmatprep.subr.mxu0 0.0
    %67 = vmatpush1.msra.mxu0 0.0
    %68 = vmatprep.subr.mxu0 0.0
    %69 = vmatpush1.msra.mxu0 0.0
    %70 = vmatprep.subr.mxu0 0.0
    %71 = vmatpush1.msra.mxu0 0.0
    %72 = vmatprep.subr.mxu0 0.0
    %73 = vmatpush1.msra.mxu0 0.0
    %74 = vmatprep.subr.mxu0 0.0
    %75 = vmatpush1.msra.mxu0 0.0
    %76 = vmatprep.subr.mxu0 0.0
    %77 = vmatpush1.msra.mxu0 0.0
    %78 = vmatprep.subr.mxu0 0.0
    %79 = vmatpush1.msra.mxu0 0.0
    %80 = vmatprep.subr.mxu0 0.0
    %81 = vmatpush1.msra.mxu0 0.0
    %82 = vmatprep.subr.mxu0 0.0
    %83 = vmatpush1.msra.mxu0 0.0
    %84 = vmatprep.subr.mxu0 0.0
    %85 = vmatpush1.msra.mxu0 0.0
    %86 = vmatprep.subr.mxu0 0.0
    %87 = vmatpush1.msra.mxu0 0.0
    %88 = vmatprep.subr.mxu0 0.0
    %89 = vmatpush1.msra.mxu0 0.0
    %90 = vmatprep.subr.mxu0 0.0
    %91 = vmatpush1.msra.mxu0 0.0
    %92 = vmatprep.subr.mxu0 0.0
    %93 = vmatpush1.msra.mxu0 0.0
    %94 = vmatprep.mubr.f32.mxu0 0.0
    %95 = vmatmul.mubr.f32.gmra.mrb[0].mxu0 %v28
    %v96 = vpop.f32.mrb[0].mxu0
    %v97 = vadd.f32 0.0, %v96
    %v98 = vpop.f32.mrb[0].mxu0
    %99 = vdwg.mxu0
    %v102 = vunpack.c.l.s4 1966171168
    %v103 = vunpack.c.0.s8 %v102
    %v104 = vlaneseq
    %v105 = vshrl.u32 %v104, 7
    %v106 = vsub.s32 %v103, %v105
    %v107 = vrot.slane %v97, %v106
    %v108 = vcombine.high %v107, %v107
    %v110 = vunpack.c.l.s4 1966171168
    %v111 = vunpack.c.0.s8 %v110
    %v112 = vlaneseq
    %v113 = vshrl.u32 %v112, 7
    %v114 = vsub.s32 %v111, %v113
    %v115 = vrot.slane %v107, %v114
    %v117 = vunpack.c.l.s4 1966171168
    %v118 = vunpack.c.0.s8 %v117
    %v119 = vlaneseq
    %v120 = vshrl.u32 %v119, 7
    %v121 = vsub.s32 %v118, %v120
    %v122 = vrot.slane %v108, %v121
    %v123 = vld [vmem:[%s1] sm:$0xff]
    %v124 = vld [vmem:[%s1 + $0x8] sm:$0xff]
    %v125 = vlaneseq
    %v126 = vshrl.u32 %v125, 7
    %v127 = vsub.s32 0, %v126
    %v128 = vrot.slane %v115, %v127
    %v129 = vlaneseq
    %v130 = vshrl.u32 %v129, 7
    %v131 = vsub.s32 0, %v130
    %v132 = vrot.slane %v122, %v131
    %v135 = vmul.f32 %v128, %v123
    %v136 = vmul.f32 %v132, %v124
    %vm137 = vcmask 130048
    %v138 = vsel %vm137, %v135, 0.0
    %139 = vadd.xlane.f32.xlu0 %v138
    %v140 = vpop.xlane.xlu0 %139
    %v141 = vsel %vm137, %v136, 0.0
    %142 = vadd.xlane.f32.xlu0 %v141
    %v143 = vpop.xlane.xlu0 %142
    %v146 = vlaneseq
    %v147 = vand.u32 %v146, 127
    %v148 = vlaneseq
    %v149 = vshrl.u32 %v148, 7
    %v150 = vsub.s32 %v147, %v149
    %v151 = vrot.slane %v140, %v150
    %v152 = vlaneseq
    %v153 = vshrl.u32 %v152, 7
    %v154 = vsub.s32 %v147, %v153
    %v155 = vrot.slane %v143, %v154
    %vm156 = vcmask 1041409
    %v157 = vsel %vm156, %v155, %v151
    %vm159 = vcmask 58368
    %v160 = vsel %vm159, %v157, -inf
    %161 = vmax.xlane.f32.xlu0 %v160
    %v162 = vpop.xlane.xlu0 %161
    %v164 = vlaneseq
    %v165 = vshrl.u32 %v164, 7
    %v166 = vsub.s32 0, %v165
    %v167 = vrot.slane %v162, %v166
    %v168 = vlaneseq
    %v169 = vshrl.u32 %v168, 7
    %v170 = vsub.s32 1, %v169
    %v171 = vrot.slane %v162, %v170
    %v174 = vsub.f32 %v140, %v167
    %v175 = vsub.f32 %v143, %v171
    %v176 = vmul.f32 %v174, 1.442695
    %v177 = vpow.pop %v176
    %v178 = vmul.f32 %v175, 1.442695
    %v179 = vpow.pop %v178
    %182 = vset.pattern.permute.xlu0 0
    %183 = vperm.xlu0 %182, %v177
    %v184 = vpop.permute.xlu0 %183
    %185 = vset.pattern.permute.xlu0 0
    %186 = vperm.xlu0 %185, %v179
    %v187 = vpop.permute.xlu0 %186
    %v188 = vlaneseq
    %v189 = vshrl.u32 %v188, 7
    %v190 = vsub.s32 %v147, %v189
    %v191 = vrot.slane %v184, %v190
    %v192 = vlaneseq
    %v193 = vshrl.u32 %v192, 7
    %v194 = vsub.s32 %v147, %v193
    %v195 = vrot.slane %v187, %v194
    %v196 = vsel %vm156, %v195, %v191
    %v198 = vsel %vm159, %v196, 0.0
    %199 = vadd.xlane.f32.xlu0 %v198
    %v200 = vpop.xlane.xlu0 %199
    %v202 = vlaneseq
    %v203 = vshrl.u32 %v202, 7
    %v204 = vsub.s32 0, %v203
    %v205 = vrot.slane %v200, %v204
    %v206 = vlaneseq
    %v207 = vshrl.u32 %v206, 7
    %v208 = vsub.s32 1, %v207
    %v209 = vrot.slane %v200, %v208
    %v212 = vrcp.pop %v205
    %v213 = vmul.f32 %v177, %v212
    %v214 = vrcp.pop %v209
    %v215 = vmul.f32 %v179, %v214
    %v216 = vld [vmem:[%s2] sm:$0xff]
    %v217 = vld [vmem:[%s2 + $0x8] sm:$0xff]
    %219 = vset.pattern.permute.xlu0 0
    %220 = vperm.xlu0 %219, %v213
    %v221 = vpop.permute.xlu0 %220
    %224 = vset.pattern.permute.xlu0 0
    %225 = vperm.xlu0 %224, %v215
    %v226 = vpop.permute.xlu0 %225
    %v228 = vmul.f32 %v221, %v216
    %v229 = vmul.f32 %v226, %v217
    %v230 = vsel %vm26, %v228, 0.0
    %v231 = vrot.slane %v230, 4
    %v232 = vadd.f32 %v230, %v231
    %v233 = vrot.slane %v232, 2
    %v234 = vadd.f32 %v232, %v233
    %v235 = vrot.slane %v234, 1
    %v236 = vadd.f32 %v234, %v235
    %v237 = vsel %vm26, %v229, 0.0
    %v238 = vrot.slane %v237, 4
    %v239 = vadd.f32 %v237, %v238
    %v240 = vrot.slane %v239, 2
    %v241 = vadd.f32 %v239, %v240
    %v242 = vrot.slane %v241, 1
    %v243 = vadd.f32 %v241, %v242
    %v246 = vsel %vm156, %v243, %v236
    %vm248 = vcmask 254976
    %249 = vst.msk [vmem:[#allocation2] sm:$0x3] %vm248, %v246
    %v250 = vlaneseq
    %v251 = vshrl.u32 %v250, 7
    %v252 = vsub.s32 %v147, %v251
    %v253 = vrot.slane %v221, %v252
    %v254 = vlaneseq
    %v255 = vshrl.u32 %v254, 7
    %v256 = vsub.s32 %v147, %v255
    %v257 = vrot.slane %v226, %v256
    %v258 = vsel %vm156, %v257, %v253
    %260 = vst.msk [vmem:[#allocation4] sm:$0x3] %vm159, %v258
    // Predicated region
    $region18: #{tpu_custom_call.1} parent=1 // pred_check
      _
    $region19: #{tpu_custom_call.1} parent=1 // pred_check_branch
      %262 = sbr.rel (0) target = $region21
    $region20: #{tpu_custom_call.1} parent=1 // pred_region
      %s264 = ssub.s32 32, 32
      %265 = vsyncadd [#allocation3], %s264
      %s267 = sshll.u32 [#allocation2], 4
      %s268 = int_to_ptr.vmem [resolvable:$true] %s267
      %270 = dma.vmem_to_hbm [thread:$0]  %s268, 32, %s4, [#allocation3]
    $region21: #{tpu_custom_call.1} parent=1 // pred_fallthru
      _
    // Predicated region
    $region22: #{tpu_custom_call.1} parent=1 // pred_check
      _
    $region23: #{tpu_custom_call.1} parent=1 // pred_check_branch
      %272 = sbr.rel (0) target = $region25
    $region24: #{tpu_custom_call.1} parent=1 // pred_region
      %s274 = ssub.s32 32, 32
      %275 = vsyncadd [#allocation5], %s274
      %s277 = sshll.u32 [#allocation4], 4
      %s278 = int_to_ptr.vmem [resolvable:$true] %s277
      %280 = dma.vmem_to_hbm [thread:$0]  %s278, 32, %s5, [#allocation5]
    $region25: #{tpu_custom_call.1} parent=1 // pred_fallthru
      _
    // Predicated region
    $region26: #{tpu_custom_call.1} parent=1 // pred_check
      _
    $region27: #{tpu_custom_call.1} parent=1 // pred_check_branch
      %282 = sbr.rel (0) target = $region29
    $region28: #{tpu_custom_call.1} parent=1 // pred_region
      %283 = dma.done [#allocation3], 32
    $region29: #{tpu_custom_call.1} parent=1 // pred_fallthru
      _
    // Predicated region
    $region30: #{tpu_custom_call.1} parent=1 // pred_check
      _
    $region31: #{tpu_custom_call.1} parent=1 // pred_check_branch
      %285 = sbr.rel (0) target = $region33
    $region32: #{tpu_custom_call.1} parent=1 // pred_region
      %286 = dma.done [#allocation5], 32
    $region33: #{tpu_custom_call.1} parent=1 // pred_fallthru
      _
    %287 = vsyncpa [#allocation3], 1
    %288 = vsyncpa [#allocation5], 1

</llo_original>
